<compile_context>
chip_gen: v7x
topology: tpu7x:2x2x1
jax: 0.10.0
libtpu: 0.0.40
codegen_flags: <defaults>
</compile_context>

<pallas_src>
import functools

import jax
import jax.numpy as jnp
from jax.experimental import pallas as pl
from jax.experimental.pallas import tpu as pltpu


def _head_decode_kernel(ctr_ref, x_ref, de_ref, *, stride):
    """Decode one (batch, spatial-tile) block.

    ctr_ref: (2, HW_T)        f32 grid centers (row 0 = cx, row 1 = cy).
    x_ref:   (1, C_in, HW_T)  raw conv logits, channel-first, spatial flattened.
    de_ref:  (1, C_out, HW_T) decoded [x, y, w, h, l0, l1, l2, l3, conf, prob...].
    """
    x = x_ref[0].astype(jnp.float32)           # cast in-VMEM (bf16 inputs OK)
    s = jnp.float32(stride)

    l = jnp.exp(x[0:4]) * s                    # (4, HW_T)  pred_l1234 (EUP)
    cx = ctr_ref[0:1]                          # (1, HW_T)
    cy = ctr_ref[1:2]                          # (1, HW_T)

    # pred_x = (xmax + xmin)/2 = cx + (l1 - l3)/2 ; pred_y = cy + (l2 - l0)/2
    pred_x = cx + 0.5 * (l[1:2] - l[3:4])
    pred_y = cy + 0.5 * (l[2:3] - l[0:1])
    pred_w = l[1:2] + l[3:4]
    pred_h = l[0:1] + l[2:3]
    conf_prob = jax.nn.sigmoid(x[4:])          # (1 + nC, HW_T)  conf + class probs

    de = jnp.concatenate([pred_x, pred_y, pred_w, pred_h, l, conf_prob], axis=0)
    de_ref[0] = de.astype(de_ref.dtype)        # one aligned slab store


def _pick_hw_tile(hw, max_tile=32768):
    """Whole plane if small; else the largest multiple of 128 dividing hw."""
    if hw <= max_tile or hw % 128 != 0:
        return hw
    t = (max_tile // 128) * 128
    while t >= 128:
        if hw % t == 0:
            return t
        t -= 128
    return hw


def head_forward(p_in, nC, stride, training=True):
    """Replicates Head.forward.

    p_in: (bs, 5+nC, nG, nG) raw conv output (NCHW).
    Returns (p, p_de):
      p    : (bs, nG, nG, 5+nC)
      p_de : (bs, nG, nG, 9+nC) if training else (bs*nG*nG, 9+nC)
    """
    bs, nG = p_in.shape[0], p_in.shape[-1]
    C_in = 4 + nC + 1
    C_out = 4 + 4 + nC + 1
    HW = nG * nG

    p_nchw = p_in.reshape(bs, C_in, nG, nG)
    x_flat = p_nchw.reshape(bs, C_in, HW)      # spatial flattened onto lane axis

    # Precompute grid centers once (tiny constant input, broadcast over batch).
    hw_idx = jnp.arange(HW, dtype=jnp.float32)
    col = jnp.mod(hw_idx, nG)
    row = jnp.floor_divide(hw_idx, nG)
    s = jnp.float32(stride)
    centers = jnp.stack([col * s + 0.5 * s, row * s + 0.5 * s], axis=0)  # (2, HW)

    hw_tile = _pick_hw_tile(HW)
    n_hw = HW // hw_tile

    kernel = functools.partial(_head_decode_kernel, stride=float(stride))
    de_flat = pl.pallas_call(
        kernel,
        out_shape=jax.ShapeDtypeStruct((bs, C_out, HW), jnp.float32),
        grid=(bs, n_hw),
        in_specs=[
            pl.BlockSpec((2, hw_tile), lambda b, h: (0, h)),
            pl.BlockSpec((1, C_in, hw_tile), lambda b, h: (b, 0, h)),
        ],
        out_specs=pl.BlockSpec((1, C_out, hw_tile), lambda b, h: (b, 0, h)),
        compiler_params=pltpu.CompilerParams(
            dimension_semantics=("parallel", "parallel")),
    )(centers, x_flat)

    # Layout glue required by the module's channel-last output contract.
    p_perm = jnp.transpose(p_nchw, (0, 2, 3, 1))                       # (bs,nG,nG,C_in)
    p_de = jnp.transpose(de_flat, (0, 2, 1)).reshape(bs, nG, nG, C_out)
    if not training:
        p_de = p_de.reshape(-1, C_out)
    return p_perm, p_de


def head_reference(p_in, nC, stride, training=True):
    """Pure-JAX reference mirroring the PyTorch code, for validation."""
    bs, nG = p_in.shape[0], p_in.shape[-1]
    p = jnp.transpose(p_in.reshape(bs, 4 + nC + 1, nG, nG), (0, 2, 3, 1))
    l1234 = p[..., 0:4]
    conf = p[..., 4:5]
    prob = p[..., 5:]
    y = jnp.broadcast_to(jnp.arange(nG)[:, None], (nG, nG))
    x = jnp.broadcast_to(jnp.arange(nG)[None, :], (nG, nG))
    grid_xy = jnp.stack([x, y], axis=-1).astype(jnp.float32)
    grid_xy = jnp.broadcast_to(grid_xy[None], (bs, nG, nG, 2))
    pl1234 = jnp.exp(l1234) * stride
    xmin = grid_xy[..., 0:1] * stride + stride / 2 - pl1234[..., 3:4]
    ymin = grid_xy[..., 1:2] * stride + stride / 2 - pl1234[..., 0:1]
    xmax = grid_xy[..., 0:1] * stride + stride / 2 + pl1234[..., 1:2]
    ymax = grid_xy[..., 1:2] * stride + stride / 2 + pl1234[..., 2:3]
    w = pl1234[..., 1:2] + pl1234[..., 3:4]
    h = pl1234[..., 0:1] + pl1234[..., 2:3]
    cx = (xmax + xmin) / 2
    cy = (ymax + ymin) / 2
    bbox = jnp.concatenate(
        [cx, cy, w, h, pl1234, jax.nn.sigmoid(conf), jax.nn.sigmoid(prob)], axis=-1)
    if not training:
        bbox = bbox.reshape(-1, 4 + 4 + nC + 1)
    return p, bbox


if __name__ == "__main__":
    nC = 4
    stride = 8
    bs, nG = 2, 16
    C_in = 4 + nC + 1   # 9 channels = l1234 + conf + nC class logits
    C_out = 4 + 4 + nC + 1

    key = jax.random.PRNGKey(0)
    x = jax.random.normal(key, (bs, C_in, nG, nG), dtype=jnp.float32)

    # training path
    p_out, p_de = head_forward(x, nC, stride, training=True)
    jax.block_until_ready((p_out, p_de))

    p_ref, de_ref_arr = head_reference(x, nC, stride, training=True)
    assert p_out.shape == (bs, nG, nG, C_in)
    assert p_de.shape == (bs, nG, nG, C_out)
    assert jnp.allclose(p_out, p_ref, atol=1e-5, rtol=1e-5)
    assert jnp.allclose(p_de, de_ref_arr, atol=1e-4, rtol=1e-4)

    # eval path (flattened boxes), like PyTorch `not self.training`
    _, p_de_eval = head_forward(x, nC, stride, training=False)
    jax.block_until_ready(p_de_eval)
    _, de_ref_eval = head_reference(x, nC, stride, training=False)
    assert p_de_eval.shape == (bs * nG * nG, C_out)
    assert jnp.allclose(p_de_eval, de_ref_eval, atol=1e-4, rtol=1e-4)

    print("KERNEL_OK")
</pallas_src>

<mosaic_0001>
module attributes {stable_mosaic.version = 11 : i64} {
  func.func @_head_decode_kernel(%arg0: i32, %arg1: i32, %arg2: memref<2x256xf32, #tpu.memory_space<vmem>>, %arg3: memref<1x9x256xf32, #tpu.memory_space<vmem>>, %arg4: memref<1x13x256xf32, #tpu.memory_space<vmem>>) attributes {dimension_semantics = [#tpu.dimension_semantics<parallel>, #tpu.dimension_semantics<parallel>], iteration_bounds = array<i64: 2, 1>, scalar_prefetch = 0 : i64, scratch_operands = 0 : i64, tpu.core_type = #tpu.core_type<tc>, window_params = [{transform_indices = @transform_0, window_bounds = array<i64: 2, 256>}, {transform_indices = @transform_1, window_bounds = array<i64: 1, 9, 256>}, {transform_indices = @transform_2, window_bounds = array<i64: 1, 13, 256>}]} {
    %c0 = arith.constant 0 : index
    %c0_0 = arith.constant 0 : index
    %c0_1 = arith.constant 0 : index
    %0 = vector.load %arg3[%c0, %c0_0, %c0_1] : memref<1x9x256xf32, #tpu.memory_space<vmem>>, vector<1x9x256xf32>
    %1 = vector.shape_cast %0 : vector<1x9x256xf32> to vector<9x256xf32>
    %2 = vector.extract_strided_slice %1 {offsets = [0, 0], sizes = [4, 256], strides = [1, 1]} : vector<9x256xf32> to vector<4x256xf32>
    %3 = math.exp %2 : vector<4x256xf32>
    %cst = arith.constant 8.000000e+00 : f32
    %4 = vector.broadcast %cst : f32 to vector<4x256xf32>
    %5 = arith.mulf %3, %4 : vector<4x256xf32>
    %c0_2 = arith.constant 0 : index
    %c0_3 = arith.constant 0 : index
    %6 = vector.load %arg2[%c0_2, %c0_3] : memref<2x256xf32, #tpu.memory_space<vmem>>, vector<1x256xf32>
    %c1 = arith.constant 1 : index
    %c0_4 = arith.constant 0 : index
    %7 = vector.load %arg2[%c1, %c0_4] : memref<2x256xf32, #tpu.memory_space<vmem>>, vector<1x256xf32>
    %8 = vector.extract_strided_slice %5 {offsets = [1, 0], sizes = [1, 256], strides = [1, 1]} : vector<4x256xf32> to vector<1x256xf32>
    %9 = vector.extract_strided_slice %5 {offsets = [3, 0], sizes = [1, 256], strides = [1, 1]} : vector<4x256xf32> to vector<1x256xf32>
    %10 = arith.subf %8, %9 : vector<1x256xf32>
    %cst_5 = arith.constant 5.000000e-01 : f32
    %11 = vector.broadcast %cst_5 : f32 to vector<1x256xf32>
    %12 = arith.mulf %11, %10 : vector<1x256xf32>
    %13 = arith.addf %6, %12 : vector<1x256xf32>
    %14 = vector.extract_strided_slice %5 {offsets = [2, 0], sizes = [1, 256], strides = [1, 1]} : vector<4x256xf32> to vector<1x256xf32>
    %15 = vector.extract_strided_slice %5 {offsets = [0, 0], sizes = [1, 256], strides = [1, 1]} : vector<4x256xf32> to vector<1x256xf32>
    %16 = arith.subf %14, %15 : vector<1x256xf32>
    %cst_6 = arith.constant 5.000000e-01 : f32
    %17 = vector.broadcast %cst_6 : f32 to vector<1x256xf32>
    %18 = arith.mulf %17, %16 : vector<1x256xf32>
    %19 = arith.addf %7, %18 : vector<1x256xf32>
    %20 = vector.extract_strided_slice %5 {offsets = [1, 0], sizes = [1, 256], strides = [1, 1]} : vector<4x256xf32> to vector<1x256xf32>
    %21 = vector.extract_strided_slice %5 {offsets = [3, 0], sizes = [1, 256], strides = [1, 1]} : vector<4x256xf32> to vector<1x256xf32>
    %22 = arith.addf %20, %21 : vector<1x256xf32>
    %23 = vector.extract_strided_slice %5 {offsets = [0, 0], sizes = [1, 256], strides = [1, 1]} : vector<4x256xf32> to vector<1x256xf32>
    %24 = vector.extract_strided_slice %5 {offsets = [2, 0], sizes = [1, 256], strides = [1, 1]} : vector<4x256xf32> to vector<1x256xf32>
    %25 = arith.addf %23, %24 : vector<1x256xf32>
    %26 = vector.extract_strided_slice %1 {offsets = [4, 0], sizes = [5, 256], strides = [1, 1]} : vector<9x256xf32> to vector<5x256xf32>
    %27 = arith.negf %26 : vector<5x256xf32>
    %28 = math.exp %27 : vector<5x256xf32>
    %cst_7 = arith.constant 1.000000e+00 : f32
    %29 = vector.broadcast %cst_7 : f32 to vector<5x256xf32>
    %30 = arith.addf %29, %28 : vector<5x256xf32>
    %31 = arith.divf %29, %30 : vector<5x256xf32>
    %32 = tpu.concatenate %13, %19, %22, %25, %5, %31 in 0 : vector<1x256xf32>, vector<1x256xf32>, vector<1x256xf32>, vector<1x256xf32>, vector<4x256xf32>, vector<5x256xf32> -> vector<13x256xf32>
    %c0_8 = arith.constant 0 : index
    %c0_9 = arith.constant 0 : index
    %c0_10 = arith.constant 0 : index
    %33 = vector.load %arg4[%c0_8, %c0_9, %c0_10] : memref<1x13x256xf32, #tpu.memory_space<vmem>>, vector<1x13x256xf32>
    %34 = vector.shape_cast %33 : vector<1x13x256xf32> to vector<13x256xf32>
    %35 = vector.shape_cast %32 : vector<13x256xf32> to vector<1x13x256xf32>
    tpu.vector_store %arg4[%c0_8, %c0_9, %c0_10], %35 {strides = array<i32>} : memref<1x13x256xf32, #tpu.memory_space<vmem>>, vector<1x13x256xf32>,
    return
  }
  func.func @transform_0(%arg0: i32, %arg1: i32) -> (i32, i32) {
    %c0_i32 = arith.constant 0 : i32
    %c0_i32_0 = arith.constant 0 : i32
    return %c0_i32, %arg1 : i32, i32
  }
  func.func @transform_1(%arg0: i32, %arg1: i32) -> (i32, i32, i32) {
    %c0_i32 = arith.constant 0 : i32
    %c0_i32_0 = arith.constant 0 : i32
    return %arg0, %c0_i32, %arg1 : i32, i32, i32
  }
  func.func @transform_2(%arg0: i32, %arg1: i32) -> (i32, i32, i32) {
    %c0_i32 = arith.constant 0 : i32
    %c0_i32_0 = arith.constant 0 : i32
    return %arg0, %c0_i32, %arg1 : i32, i32, i32
  }
}

</mosaic_0001>

<llo_original>
// kernel: tpu_custom_call.1
$region0: #{tpu_custom_call.1}
  #allocation0 [shape = 'u32[]', space=smem, size = 0x4, offset = 0x4, fixed_abs, tag = 'smem constant byte address 0x4 - core index']
  #allocation1 [shape = 'u32[144,128]{1,0:T(1,128)}', space=vmem, size = 0x12000, scoped, tag = 'internal scratch']
  %s0 = inlined_call_operand.vmem [shape: f32[2,256], index: 0, kind: input, shape index: {}]
  %s1 = inlined_call_operand.vmem [shape: f32[2,9,256], index: 1, kind: input, shape index: {}]
  %s2 = inlined_call_operand.vmem [shape: f32[2,13,256], index: 2, kind: output, shape index: {}]
  %s3 = sld [smem:[#allocation0]]
  $region41: #{tpu_custom_call.1} parent=0
    _
  %s5 = ssub.s32 1, %s3
  %s6 = scalar_select 0, %s5, %s3
  loop: start=0, step=1, limit=4
  $region2: #{tpu_custom_call.1} parent=0 // loop_pre_header
    _
  $region3: #{tpu_custom_call.1} parent=0 // loop_header
    %s8 = sphi 0, %s12
    %p9 = scmp.ge.s32.totalorder %s8, 4
    %s15 = sphi 0, %s27
    %s16 = sphi 0, %s23
    %s17 = sphi 0, %s15
    %s18 = sphi 0, %s16
    %s19 = sphi 0, %s17
    %s20 = sphi 0, %s18
    %s30 = sphi 0, %s32
    %s33 = sphi 0, %s30
    %s34 = sphi 0, %s33
    %s50 = sphi 0, %s34
    %s58 = sphi 0, %s60
    %s61 = sphi 0, %s58
    %s62 = sphi 0, %s61
    %s78 = sphi 0, %s62
    %s86 = sphi 0, %s88
    %s89 = sphi 0, %s86
    %s90 = sphi 0, %s89
    %s106 = sphi 0, %s90
  $region4: #{tpu_custom_call.1} parent=0 // loop_header_branch
    %11 = sbr.rel (%p9) target = $region8
  $region5: #{tpu_custom_call.1} parent=0 // loop_body
    %s13 = ssub.s32 %s8, 1
    %s14 = ssub.s32 %s8, 2
    %s21 = sadd.s32 1, %s16
    %p22 = scmp.ge.s32.totalorder %s21, 1
    %s23 = scalar_select %p22, 0, %s21
    %s24 = sadd.s32 1, %s15
    %s25 = scalar_select %p22, %s24, %s15
    %p26 = scmp.ge.s32.totalorder %s25, 2
    %s27 = scalar_select %p26, 0, %s25
    %s28 = ssub.s32 %s16, %s23
    %p29 = scmp.eq.s32.totalorder %s28, 0
    %s31 = sadd.s32 %s30, 1
    %s32 = scalar_select %p29, %s30, %s31
    %p35 = pneg %p29
    %p36 = scmp.eq.s32.totalorder %s8, 1
    %p37 = por %p35, %p36
    %p38 = scmp.ne.s32.totalorder %s30, %s33
    %p39 = scmp.eq.s32.totalorder %s8, 0
    %p40 = por %p38, %p39
    %p41 = scmp.ne.s32.totalorder %s30, %s33
    %p42 = scmp.eq.s32.totalorder %s13, 1
    %p43 = por %p41, %p42
    %p44 = scmp.ne.s32.totalorder %s33, %s34
    %p45 = scmp.eq.s32.totalorder %s13, 0
    %p46 = por %p44, %p45
    %p47 = scmp.ne.s32.totalorder %s33, %s34
    %p48 = scmp.eq.s32.totalorder %s14, 1
    %p49 = por %p47, %p48
    %p51 = scmp.ne.s32.totalorder %s34, %s50
    %p52 = scmp.eq.s32.totalorder %s14, 0
    %p53 = por %p51, %p52
    %s54 = ssub.s32 %s15, %s27
    %s55 = ssub.s32 %s16, %s23
    %s56 = sor.u32 %s54, %s55
    %p57 = scmp.eq.s32.totalorder %s56, 0
    %s59 = sadd.s32 %s58, 1
    %s60 = scalar_select %p57, %s58, %s59
    %p63 = pneg %p57
    %p64 = scmp.eq.s32.totalorder %s8, 1
    %p65 = por %p63, %p64
    %p66 = scmp.ne.s32.totalorder %s58, %s61
    %p67 = scmp.eq.s32.totalorder %s8, 0
    %p68 = por %p66, %p67
    %p69 = scmp.ne.s32.totalorder %s58, %s61
    %p70 = scmp.eq.s32.totalorder %s13, 1
    %p71 = por %p69, %p70
    %p72 = scmp.ne.s32.totalorder %s61, %s62
    %p73 = scmp.eq.s32.totalorder %s13, 0
    %p74 = por %p72, %p73
    %p75 = scmp.ne.s32.totalorder %s61, %s62
    %p76 = scmp.eq.s32.totalorder %s14, 1
    %p77 = por %p75, %p76
    %p79 = scmp.ne.s32.totalorder %s62, %s78
    %p80 = scmp.eq.s32.totalorder %s14, 0
    %p81 = por %p79, %p80
    %s82 = ssub.s32 %s15, %s27
    %s83 = ssub.s32 %s16, %s23
    %s84 = sor.u32 %s82, %s83
    %p85 = scmp.eq.s32.totalorder %s84, 0
    %s87 = sadd.s32 %s86, 1
    %s88 = scalar_select %p85, %s86, %s87
    %p91 = pneg %p85
    %p92 = scmp.eq.s32.totalorder %s8, 1
    %p93 = por %p91, %p92
    %p94 = scmp.ne.s32.totalorder %s86, %s89
    %p95 = scmp.eq.s32.totalorder %s8, 0
    %p96 = por %p94, %p95
    %p97 = scmp.ne.s32.totalorder %s86, %s89
    %p98 = scmp.eq.s32.totalorder %s13, 1
    %p99 = por %p97, %p98
    %p100 = scmp.ne.s32.totalorder %s89, %s90
    %p101 = scmp.eq.s32.totalorder %s13, 0
    %p102 = por %p100, %p101
    %p103 = scmp.ne.s32.totalorder %s89, %s90
    %p104 = scmp.eq.s32.totalorder %s14, 1
    %p105 = por %p103, %p104
    %p107 = scmp.ne.s32.totalorder %s90, %s106
    %p108 = scmp.eq.s32.totalorder %s14, 0
    %p109 = por %p107, %p108
    %p110 = scmp.le.s32.totalorder 1, %s8
    %p111 = scmp.lt.s32.totalorder %s8, 3
    %p112 = pnand %p110, %p111
    %p113 = pneg %p112
    // Predicated region
    $region9: #{tpu_custom_call.1} parent=5 // pred_check
      _
    $region10: #{tpu_custom_call.1} parent=5 // pred_check_branch
      %115 = sbr.rel (%p112) target = $region12
    $region11: #{tpu_custom_call.1} parent=5 // pred_region
      %s116 = ssub.s32 %s8, 1
      // Predicated region
      $region13: #{tpu_custom_call.1} parent=11 // pred_check
        %p117 = pneg %p46
      $region14: #{tpu_custom_call.1} parent=11 // pred_check_branch
        %119 = sbr.rel (%p117) target = $region16
      $region15: #{tpu_custom_call.1} parent=11 // pred_region
        %s120 = smul.u32 2, %s18
        %p121 = scmp.lt.s32.totalorder %s120, 1
        %s122 = scalar_select %p121, %s120, 1
        %s123 = smul.addr %s122, 2
        %s124 = scalar_lea.vmem %s0, %s123
        %s125 = smul.u32 2, %s18
      $region16: #{tpu_custom_call.1} parent=11 // pred_fallthru
        _
    $region12: #{tpu_custom_call.1} parent=5 // pred_fallthru
      _
    %p126 = scmp.lt.s32.totalorder %s8, 2
    // Predicated region
    $region17: #{tpu_custom_call.1} parent=5 // pred_check
      %p127 = pneg %p126
    $region18: #{tpu_custom_call.1} parent=5 // pred_check_branch
      %129 = sbr.rel (%p127) target = $region20
    $region19: #{tpu_custom_call.1} parent=5 // pred_region
      // Predicated region
      $region21: #{tpu_custom_call.1} parent=19 // pred_check
        %p130 = pneg %p68
      $region22: #{tpu_custom_call.1} parent=19 // pred_check_branch
        %132 = sbr.rel (%p130) target = $region24
      $region23: #{tpu_custom_call.1} parent=19 // pred_region
        %s133 = smul.u32 2, %s16
        %p134 = scmp.lt.s32.totalorder %s15, 1
        %s135 = scalar_select %p134, %s15, 1
        %p136 = scmp.lt.s32.totalorder %s133, 1
        %s137 = scalar_select %p136, %s133, 1
        %s138 = smul.addr %s135, 4
        %s139 = sadd.s32 %s137, %s138
        %s140 = smul.addr %s139, 8
        %s141 = scalar_lea.vmem %s1, %s140
        %s142 = smul.u32 2, %s16
      $region24: #{tpu_custom_call.1} parent=19 // pred_fallthru
        _
    $region20: #{tpu_custom_call.1} parent=5 // pred_fallthru
      _
    %p143 = scmp.le.s32.totalorder 1, %s8
    %p144 = scmp.lt.s32.totalorder %s8, 3
    %p145 = pnand %p143, %p144
    %p146 = pneg %p145
    // Predicated region
    $region25: #{tpu_custom_call.1} parent=5 // pred_check
      _
    $region26: #{tpu_custom_call.1} parent=5 // pred_check_branch
      %148 = sbr.rel (%p145) target = $region28
    $region27: #{tpu_custom_call.1} parent=5 // pred_region
      %s149 = ssub.s32 %s8, 1
      %s150 = smul.u32 2, %s18
      %p151 = scmp.lt.s32.totalorder %s150, 1
      %s152 = scalar_select %p151, %s150, 1
      %s153 = smul.addr %s152, 2
      %s154 = scalar_lea.vmem %s0, %s153
      %p155 = pneg %p46
      %p156 = pneg %p43
      %s157 = smul.u32 2, %s18
      %p158 = scmp.lt.s32.totalorder %s17, 1
      %s159 = scalar_select %p158, %s17, 1
      %p160 = scmp.lt.s32.totalorder %s157, 1
      %s161 = scalar_select %p160, %s157, 1
      %s162 = smul.addr %s159, 4
      %s163 = sadd.s32 %s161, %s162
      %s164 = smul.addr %s163, 8
      %s165 = scalar_lea.vmem %s1, %s164
      %p166 = pneg %p74
      %p167 = pneg %p71
      %p168 = pneg %p102
      %p169 = pneg %p99
      %s170 = smul.u32 2, %s18
      %p171 = scmp.lt.s32.totalorder %s17, 1
      %s172 = scalar_select %p171, %s17, 1
      %p173 = scmp.lt.s32.totalorder %s170, 1
      %s174 = scalar_select %p173, %s170, 1
      %s175 = smul.addr %s172, 4
      %s176 = sadd.s32 %s174, %s175
      %s177 = smul.addr %s176, 8
      %s178 = scalar_lea.vmem %s2, %s177
      %s179 = smul.u32 2, %s18
      %p180 = scmp.lt.s32.totalorder %s179, 1
      %s181 = scalar_select %p180, %s179, 1
      %s182 = smul.addr %s181, 2
      %s183 = scalar_lea.vmem %s0, %s182
      %s184 = smul.u32 2, %s18
      %s185 = smul.u32 2, %s18
      %p186 = scmp.lt.s32.totalorder %s17, 1
      %s187 = scalar_select %p186, %s17, 1
      %p188 = scmp.lt.s32.totalorder %s185, 1
      %s189 = scalar_select %p188, %s185, 1
      %s190 = smul.addr %s187, 4
      %s191 = sadd.s32 %s189, %s190
      %s192 = smul.addr %s191, 8
      %s193 = scalar_lea.vmem %s1, %s192
      %s194 = smul.u32 2, %s18
      %s195 = smul.u32 2, %s18
      %p196 = scmp.lt.s32.totalorder %s17, 1
      %s197 = scalar_select %p196, %s17, 1
      %p198 = scmp.lt.s32.totalorder %s195, 1
      %s199 = scalar_select %p198, %s195, 1
      %s200 = smul.addr %s197, 4
      %s201 = sadd.s32 %s199, %s200
      %s202 = smul.addr %s201, 8
      %s203 = scalar_lea.vmem %s2, %s202
      %s204 = smul.u32 2, %s18
      %v205 = vld [vmem:[%s193] sm:$0xff]
      %v206 = vld [vmem:[%s193 + $0x8] sm:$0xff]
      %v207 = vld [vmem:[%s193 + $0x10] sm:$0x1]
      %v208 = vld [vmem:[%s193 + $0x18] sm:$0x1]
      %v209 = vmul.f32 %v205, 1.442695
      %v210 = vpow.pop %v209
      %v211 = vmul.f32 %v206, 1.442695
      %v212 = vpow.pop %v211
      %v213 = vmul.f32 %v210, 8.0
      %v214 = vmul.f32 %v212, 8.0
      %v215 = vld [vmem:[%s183] ss:$2 sm:$0x3]
      %s216 = scalar_lea.vmem %s183, 1
      %v217 = vld [vmem:[%s216] ss:$2 sm:$0x3]
      %v220 = vrot.slane %v213, 2
      %v221 = vrot.slane %v214, 2
      %v224 = vsub.f32 %v213, %v220
      %v225 = vsub.f32 %v214, %v221
      %v226 = vmul.f32 %v224, 0.5
      %v227 = vmul.f32 %v225, 0.5
      %v230 = vcombine.low %v226, %v227
      %v232 = vunpack.c.l.s4 1966171168
      %v233 = vunpack.c.0.s8 %v232
      %v234 = vlaneseq
      %v235 = vshrl.u32 %v234, 7
      %v236 = vsub.s32 %v233, %v235
      %v237 = vrot.slane %v230, %v236
      %v238 = vcombine.high %v237, %v237
      %v240 = vunpack.c.l.s4 1966171168
      %v241 = vunpack.c.0.s8 %v240
      %v242 = vlaneseq
      %v243 = vshrl.u32 %v242, 7
      %v244 = vsub.s32 %v241, %v243
      %v245 = vrot.slane %v238, %v244
      %v247 = vadd.f32 %v215, %v245
      %v248 = vrot.slane %v213, 6
      %v249 = vrot.slane %v214, 6
      %v252 = vsub.f32 %v213, %v248
      %v253 = vsub.f32 %v214, %v249
      %v254 = vmul.f32 %v252, 0.5
      %v255 = vmul.f32 %v253, 0.5
      %v258 = vcombine.low %v254, %v255
      %v260 = vunpack.c.l.s4 1966171168
      %v261 = vunpack.c.0.s8 %v260
      %v262 = vlaneseq
      %v263 = vshrl.u32 %v262, 7
      %v264 = vsub.s32 %v261, %v263
      %v265 = vrot.slane %v258, %v264
      %v267 = vunpack.c.l.s4 1966171168
      %v268 = vunpack.c.0.s8 %v267
      %v269 = vlaneseq
      %v270 = vshrl.u32 %v269, 7
      %v271 = vsub.s32 %v268, %v270
      %v272 = vrot.slane %v265, %v271
      %v273 = vcombine.high %v272, %v272
      %v275 = vadd.f32 %v217, %v273
      %v276 = vadd.f32 %v213, %v220
      %v277 = vadd.f32 %v214, %v221
      %v278 = vxor.u32 %v205, 2147483648
      %v279 = vxor.u32 %v206, 2147483648
      %v280 = vxor.u32 %v207, 2147483648
      %v281 = vxor.u32 %v208, 2147483648
      %v282 = vmul.f32 %v278, 1.442695
      %v283 = vpow.pop %v282
      %v284 = vmul.f32 %v279, 1.442695
      %v285 = vpow.pop %v284
      %v286 = vmul.f32 %v280, 1.442695
      %v287 = vpow.pop %v286
      %v288 = vmul.f32 %v281, 1.442695
      %v289 = vpow.pop %v288
      %v290 = vadd.f32 %v283, 1.0
      %v291 = vadd.f32 %v285, 1.0
      %v292 = vadd.f32 %v287, 1.0
      %v293 = vadd.f32 %v289, 1.0
      %v294 = vrcp.pop %v290
      %v295 = vmul.f32 1.0, %v294
      %v296 = vrcp.pop %v291
      %v297 = vmul.f32 1.0, %v296
      %v298 = vrcp.pop %v292
      %v299 = vmul.f32 1.0, %v298
      %v300 = vrcp.pop %v293
      %v301 = vmul.f32 1.0, %v300
      %v303 = vlaneseq
      %v304 = vshrl.u32 %v303, 7
      %v305 = vsub.s32 0, %v304
      %v306 = vrot.slane %v247, %v305
      %v307 = vlaneseq
      %v308 = vshrl.u32 %v307, 7
      %v309 = vsub.s32 1, %v308
      %v310 = vrot.slane %v247, %v309
      %v314 = vlaneseq
      %v315 = vshrl.u32 %v314, 7
      %v316 = vsub.s32 0, %v315
      %v317 = vrot.slane %v275, %v316
      %v318 = vlaneseq
      %v319 = vshrl.u32 %v318, 7
      %v320 = vsub.s32 1, %v319
      %v321 = vrot.slane %v275, %v320
      %v326 = vrot.slane %v276, 7
      %v327 = vrot.slane %v277, 7
      %v330 = vrot.slane %v276, 5
      %v331 = vrot.slane %v277, 5
      %v334 = vrot.slane %v213, 4
      %v335 = vrot.slane %v214, 4
      %vm342 = vcmask 1043456
      %v343 = vrot.slane %v295, 4
      %v344 = vrot.slane %v299, 4
      %v345 = vsel %vm342, %v343, %v344
      %v346 = vrot.slane %v297, 4
      %v347 = vrot.slane %v301, 4
      %v348 = vsel %vm342, %v346, %v347
      %vm351 = vcmask 1040384
      %v352 = vsel %vm351, %v306, %v317
      %v353 = vsel %vm351, %v310, %v321
      %vm354 = vcmask 1041408
      %v355 = vsel %vm354, %v352, %v326
      %v356 = vsel %vm354, %v353, %v327
      %vm357 = vcmask 1042432
      %v358 = vsel %vm357, %v355, %v330
      %v359 = vsel %vm357, %v356, %v331
      %v360 = vsel %vm342, %v358, %v334
      %v361 = vsel %vm342, %v359, %v335
      %362 = vst [vmem:[%s203] sm:$0xff] %v360
      %363 = vst [vmem:[%s203 + $0x8] sm:$0xff] %v361
      %364 = vst [vmem:[%s203 + $0x10] sm:$0x1f] %v345
      %365 = vst [vmem:[%s203 + $0x18] sm:$0x1f] %v348
      %s366 = smul.u32 2, %s18
      %p367 = scmp.lt.s32.totalorder %s17, 1
      %s368 = scalar_select %p367, %s17, 1
      %p369 = scmp.lt.s32.totalorder %s366, 1
      %s370 = scalar_select %p369, %s366, 1
      %s371 = smul.addr %s368, 4
      %s372 = sadd.s32 %s370, %s371
      %s373 = smul.addr %s372, 8
      %s374 = scalar_lea.vmem %s2, %s373
      // Predicated region
      $region29: #{tpu_custom_call.1} parent=27 // pred_check
        %p375 = pneg %p99
      $region30: #{tpu_custom_call.1} parent=27 // pred_check_branch
        %377 = sbr.rel (%p375) target = $region32
      $region31: #{tpu_custom_call.1} parent=27 // pred_region
        %s378 = smul.u32 2, %s18
      $region32: #{tpu_custom_call.1} parent=27 // pred_fallthru
        _
    $region28: #{tpu_custom_call.1} parent=5 // pred_fallthru
      _
    %p379 = scmp.le.s32.totalorder 2, %s8
    // Predicated region
    $region33: #{tpu_custom_call.1} parent=5 // pred_check
      %p380 = pneg %p379
    $region34: #{tpu_custom_call.1} parent=5 // pred_check_branch
      %382 = sbr.rel (%p380) target = $region36
    $region35: #{tpu_custom_call.1} parent=5 // pred_region
      %s383 = ssub.s32 %s8, 2
      // Predicated region
      $region37: #{tpu_custom_call.1} parent=35 // pred_check
        %p384 = pneg %p105
      $region38: #{tpu_custom_call.1} parent=35 // pred_check_branch
        %386 = sbr.rel (%p384) target = $region40
      $region39: #{tpu_custom_call.1} parent=35 // pred_region
        %s387 = smul.u32 2, %s20
        %p388 = scmp.lt.s32.totalorder %s19, 1
        %s389 = scalar_select %p388, %s19, 1
        %p390 = scmp.lt.s32.totalorder %s387, 1
        %s391 = scalar_select %p390, %s387, 1
        %s392 = smul.addr %s389, 4
        %s393 = sadd.s32 %s391, %s392
        %s394 = smul.addr %s393, 8
        %s395 = scalar_lea.vmem %s2, %s394
      $region40: #{tpu_custom_call.1} parent=35 // pred_fallthru
        _
    $region36: #{tpu_custom_call.1} parent=5 // pred_fallthru
      _
  $region6: #{tpu_custom_call.1} parent=0 // loop_footer
    %s12 = sadd.s32 1, %s8
  $region7: #{tpu_custom_call.1} parent=0 // loop_footer_branch
    %7 = sbr.rel target = $region3
  $region8: #{tpu_custom_call.1} parent=0 // loop_exit
    _

</llo_original>
